<compile_context>
chip_gen: v7x
topology: tpu7x:2x2x1
jax: 0.10.0
libtpu: 0.0.40
codegen_flags: <defaults>
</compile_context>

<pallas_src>
import jax
import jax.numpy as jnp
from jax.experimental import pallas as pl
from jax.experimental.pallas import tpu as pltpu


_BLOCK_BYTE_BUDGET = 4 << 20   # ~4 MiB/block: roofline plateau; 2x(in+out) ~= 16 MiB
_SINGLE_BLOCK_BYTES = 1 << 20  # below this, one block (per-step overhead dominates)


def _normalize_kernel(x_ref, sb_ref, o_ref):
    """o <- x * scale_row + bias_row  (scale = 1/sd, bias = -mean/sd)."""
    sb = sb_ref[...]                 # (tm, 2): col 0 = scale, col 1 = bias
    scale = sb[:, 0:1]
    bias = sb[:, 1:2]
    o_ref[...] = (x_ref[...] * scale + bias).astype(o_ref.dtype)


def _cdiv(a, b):
    return -(-a // b)


def _divisors(n):
    small, large = [], []
    i = 1
    while i * i <= n:
        if n % i == 0:
            small.append(i)
            if i != n // i:
                large.append(n // i)
        i += 1
    return small + large[::-1]


def _largest_aligned_divisor(n, align, cap):
    """Largest divisor of n that is a multiple of `align` and <= cap (0 if none)."""
    best = 0
    for d in _divisors(n):
        if d % align == 0 and d <= cap and d > best:
            best = d
    return best


def _sublane_multiple(dtype):
    """Sublane packing multiple: 8 for f32, 16 for bf16/f16, 32 for int8/fp8."""
    return max(8, 32 // max(1, jnp.dtype(dtype).itemsize))


def _choose_row_split(m, n, sublane):
    """Pick k | n so (m, n) -> (m*k, n//k) is lane-dense and sublane-friendly."""
    if n % 128 == 0 and m % sublane == 0:
        return 1
    best_k, best_score = 1, None
    for k in _divisors(n):
        n2, m2 = n // k, m * k
        score = (
            n2 % 128 == 0,        # unmasked, lane-dense stores
            m2 % sublane == 0,    # full sublane / vreg packing
            min(n2, 4096),        # keep lanes reasonably wide
            -k,                   # least-disruptive split on ties
        )
        if best_score is None or score > best_score:
            best_k, best_score = k, score
    return best_k


def _choose_tiles(m, n, itemsize, sublane):
    """Joint tile sizing from a byte budget; returns (tm, tn)."""
    total = m * n * itemsize

    # Whole-tensor fast path: single block, no per-step pipeline overhead.
    if total <= _SINGLE_BLOCK_BYTES:
        return m, n

    # Lane tile first: largest 128-aligned size (exact divisor preferred).
    lane_cap = max(128, _BLOCK_BYTE_BUDGET // (sublane * itemsize))
    if n <= 128:
        tn = n
    elif n % 128 == 0:
        tn = _largest_aligned_divisor(n, 128, min(n, lane_cap)) or 128
    else:
        # Unaligned lane dim: full-dim block if it fits per sublane-row of budget,
        # else a 128-aligned tile (one masked edge block).
        if n * sublane * itemsize <= _BLOCK_BYTE_BUDGET:
            tn = n
        else:
            tn = (min(n, lane_cap) // 128) * 128

    # Row tile from the remaining budget, rounded to the sublane multiple.
    rows_budget = max(1, _BLOCK_BYTE_BUDGET // (tn * itemsize))
    if rows_budget >= m:
        tm = m
    else:
        tm = max(8, (rows_budget // sublane) * sublane)
        tm = min(tm, (m // 8) * 8) if m >= 8 else m

    # Feed both v7x TensorCores: guarantee >=2 blocks along a parallel axis.
    if _cdiv(m, tm) * _cdiv(n, tn) < 2:
        if m >= 16:
            tm = max(8, (((m + 1) // 2) // 8) * 8)
        elif n >= 256 and tn == n and n % 128 == 0:
            tn = _largest_aligned_divisor(n, 128, n // 2) or tn
    return tm, tn


def normalize_nchw(x, mean, sd):
    """(x - mean[c]) / sd[c] for x in NCHW layout, via a tiled Pallas kernel."""
    b, c, h, w = x.shape
    m, n = b * c, h * w
    dtype = x.dtype
    itemsize = jnp.dtype(dtype).itemsize
    sublane = _sublane_multiple(dtype)

    # Per-channel scale / bias, precomputed in f32, cast once to the input dtype.
    mean_c = jnp.broadcast_to(jnp.asarray(mean, jnp.float32).reshape(-1), (c,))
    sd_c = jnp.broadcast_to(jnp.asarray(sd, jnp.float32).reshape(-1), (c,))
    scale_c = 1.0 / sd_c
    bias_c = -mean_c * scale_c

    # Re-factor (B*C, H*W) -> (B*C*k, H*W/k) for sublane/lane density.
    k = _choose_row_split(m, n, sublane)
    m2, n2 = m * k, n // k
    x2 = x.reshape(m2, n2)

    # Row r of the slab corresponds to channel (r // k) % C.
    scale_rows = jnp.tile(jnp.repeat(scale_c, k), b)
    bias_rows = jnp.tile(jnp.repeat(bias_c, k), b)
    sb = jnp.stack([scale_rows, bias_rows], axis=-1).astype(dtype)  # (m2, 2)

    tm, tn = _choose_tiles(m2, n2, itemsize, sublane)
    grid = (_cdiv(m2, tm), _cdiv(n2, tn))

    # VMEM budget: double-buffered in + out blocks plus headroom; at least the
    # v5e default, never anywhere near v7x's 64 MiB physical.
    block_bytes = tm * tn * itemsize
    vmem_limit = int(min(max(4 * block_bytes + (4 << 20), 16 << 20), 48 << 20))

    out = pl.pallas_call(
        _normalize_kernel,
        out_shape=jax.ShapeDtypeStruct((m2, n2), dtype),
        grid=grid,
        in_specs=[
            pl.BlockSpec((tm, tn), lambda i, j: (i, j)),
            pl.BlockSpec((tm, 2), lambda i, j: (i, 0)),
        ],
        out_specs=pl.BlockSpec((tm, tn), lambda i, j: (i, j)),
        compiler_params=pltpu.CompilerParams(
            dimension_semantics=("parallel", "parallel"),
            vmem_limit_bytes=vmem_limit),
    )(x2, sb)
    return out.reshape(b, c, h, w)


class Normalization:
    """JAX/Pallas port of the PyTorch Normalization module."""

    def __init__(self, mean, sd):
        self.mean = jnp.asarray(mean).reshape(-1, 1, 1)
        self.sd = jnp.asarray(sd).reshape(-1, 1, 1)

    def __call__(self, inp):
        squeeze = False
        if inp.ndim == 3:  # (C, H, W): same broadcasting behavior as PyTorch
            inp = inp[None]
            squeeze = True
        out = normalize_nchw(inp, self.mean, self.sd)
        return out[0] if squeeze else out


if __name__ == "__main__":
    key = jax.random.PRNGKey(0)

    # Case 1: small batched input (the module's canonical shape).
    B, C, H, W = 2, 4, 16, 16
    x = jax.random.normal(key, (B, C, H, W), dtype=jnp.float32)
    mean = jnp.array([0.485, 0.456, 0.406, 0.5], dtype=jnp.float32)
    sd = jnp.array([0.229, 0.224, 0.225, 0.23], dtype=jnp.float32)

    norm = Normalization(mean, sd)
    out = jax.block_until_ready(norm(x))
    ref = (x - mean.reshape(-1, 1, 1)) / sd.reshape(-1, 1, 1)
    assert out.shape == x.shape and out.dtype == x.dtype
    assert jnp.allclose(out, ref, rtol=1e-5, atol=1e-5), float(
        jnp.max(jnp.abs(out - ref)))

    # Case 2: single 3-channel image (exercises the sublane re-factor path).
    x3 = jax.random.normal(jax.random.PRNGKey(1), (3, 32, 32), dtype=jnp.float32)
    mean3 = jnp.array([0.485, 0.456, 0.406], dtype=jnp.float32)
    sd3 = jnp.array([0.229, 0.224, 0.225], dtype=jnp.float32)
    norm3 = Normalization(mean3, sd3)
    out3 = jax.block_until_ready(norm3(x3))
    ref3 = (x3 - mean3.reshape(-1, 1, 1)) / sd3.reshape(-1, 1, 1)
    assert out3.shape == x3.shape and out3.dtype == x3.dtype
    assert jnp.allclose(out3, ref3, rtol=1e-5, atol=1e-5), float(
        jnp.max(jnp.abs(out3 - ref3)))

    print("KERNEL_OK")
</pallas_src>

<mosaic_0001>
module attributes {stable_mosaic.version = 11 : i64} {
  func.func @_normalize_kernel(%arg0: i32, %arg1: i32, %arg2: memref<8x256xf32, #tpu.memory_space<vmem>>, %arg3: memref<8x2xf32, #tpu.memory_space<vmem>>, %arg4: memref<8x256xf32, #tpu.memory_space<vmem>>) attributes {dimension_semantics = [#tpu.dimension_semantics<parallel>, #tpu.dimension_semantics<parallel>], iteration_bounds = array<i64: 1, 1>, scalar_prefetch = 0 : i64, scratch_operands = 0 : i64, tpu.core_type = #tpu.core_type<tc>, window_params = [{transform_indices = @transform_0, window_bounds = array<i64: 8, 256>}, {transform_indices = @transform_1, window_bounds = array<i64: 8, 2>}, {transform_indices = @transform_2, window_bounds = array<i64: 8, 256>}]} {
    %c0 = arith.constant 0 : index
    %c0_0 = arith.constant 0 : index
    %0 = vector.load %arg3[%c0, %c0_0] : memref<8x2xf32, #tpu.memory_space<vmem>>, vector<8x2xf32>
    %1 = vector.extract_strided_slice %0 {offsets = [0, 0], sizes = [8, 1], strides = [1, 1]} : vector<8x2xf32> to vector<8x1xf32>
    %2 = vector.extract_strided_slice %0 {offsets = [0, 1], sizes = [8, 1], strides = [1, 1]} : vector<8x2xf32> to vector<8x1xf32>
    %c0_1 = arith.constant 0 : index
    %c0_2 = arith.constant 0 : index
    %3 = vector.load %arg2[%c0_1, %c0_2] : memref<8x256xf32, #tpu.memory_space<vmem>>, vector<8x256xf32>
    %4 = vector.broadcast %1 : vector<8x1xf32> to vector<8x256xf32>
    %5 = arith.mulf %3, %4 : vector<8x256xf32>
    %6 = vector.broadcast %2 : vector<8x1xf32> to vector<8x256xf32>
    %7 = arith.addf %5, %6 : vector<8x256xf32>
    %c0_3 = arith.constant 0 : index
    %c0_4 = arith.constant 0 : index
    %8 = vector.load %arg4[%c0_3, %c0_4] : memref<8x256xf32, #tpu.memory_space<vmem>>, vector<8x256xf32>
    tpu.vector_store %arg4[%c0_3, %c0_4], %7 {strides = array<i32>} : memref<8x256xf32, #tpu.memory_space<vmem>>, vector<8x256xf32>,
    return
  }
  func.func @transform_0(%arg0: i32, %arg1: i32) -> (i32, i32) {
    %c0_i32 = arith.constant 0 : i32
    return %arg0, %arg1 : i32, i32
  }
  func.func @transform_1(%arg0: i32, %arg1: i32) -> (i32, i32) {
    %c0_i32 = arith.constant 0 : i32
    %c0_i32_0 = arith.constant 0 : i32
    return %arg0, %c0_i32 : i32, i32
  }
  func.func @transform_2(%arg0: i32, %arg1: i32) -> (i32, i32) {
    %c0_i32 = arith.constant 0 : i32
    return %arg0, %arg1 : i32, i32
  }
}

</mosaic_0001>

<llo_original>
// kernel: tpu_custom_call.1
$region0: #{tpu_custom_call.1}
  #allocation0 [shape = 'u32[]', space=smem, size = 0x4, offset = 0x4, fixed_abs, tag = 'smem constant byte address 0x4 - core index']
  #allocation1 [shape = 'u32[144,128]{1,0:T(1,128)}', space=vmem, size = 0x12000, scoped, tag = 'internal scratch']
  %s0 = inlined_call_operand.hbm [shape: f32[8,256], index: 0, kind: input, shape index: {}]
  %s1 = inlined_call_operand.vmem [shape: f32[8,2], index: 1, kind: input, shape index: {}]
  %s2 = inlined_call_operand.hbm [shape: f32[8,256], index: 2, kind: output, shape index: {}]
  %s3 = sld [smem:[#allocation0]]
  $region22: #{tpu_custom_call.1} parent=0
    _
  %s5 = ssub.s32 1, %s3
  %s6 = scalar_select 0, %s5, %s3
  $region1: #{tpu_custom_call.1} parent=0
    #allocation2 [shape = 'u8[8192]{0}', space=vmem, size = 0x2000, scoped, tag = 'input window, operand 0, single buffered']
    #allocation3 [shape = 's32[1]{0}', space=sflag, size = 0x4, scoped, tag = 'scoped memory for tpu_custom_call.1']
    #allocation4 [shape = 's32[1]{0}', space=sflag, size = 0x4, scoped, tag = 'scoped memory for tpu_custom_call.1']
    #allocation5 [shape = 'u8[8192]{0}', space=vmem, size = 0x2000, scoped, tag = 'output window, operand 0, single buffered']
    %7 = vsyncpa [#allocation3], 0
    %8 = vsyncpa [#allocation4], 0
    // Predicated region
    $region2: #{tpu_custom_call.1} parent=1 // pred_check
      _
    $region3: #{tpu_custom_call.1} parent=1 // pred_check_branch
      %10 = sbr.rel (0) target = $region5
    $region4: #{tpu_custom_call.1} parent=1 // pred_region
      %s12 = ssub.s32 256, 256
      %13 = vsyncadd [#allocation3], %s12
      %s15 = sshll.u32 [#allocation2], 4
      %s16 = int_to_ptr.vmem [resolvable:$true] %s15
      %18 = dma.hbm_to_vmem [thread:$0]  %s0, 256, %s16, [#allocation3]
    $region5: #{tpu_custom_call.1} parent=1 // pred_fallthru
      _
    // Predicated region
    $region6: #{tpu_custom_call.1} parent=1 // pred_check
      _
    $region7: #{tpu_custom_call.1} parent=1 // pred_check_branch
      %20 = sbr.rel (0) target = $region9
    $region8: #{tpu_custom_call.1} parent=1 // pred_region
      _
    $region9: #{tpu_custom_call.1} parent=1 // pred_fallthru
      _
    // Predicated region
    $region10: #{tpu_custom_call.1} parent=1 // pred_check
      _
    $region11: #{tpu_custom_call.1} parent=1 // pred_check_branch
      %22 = sbr.rel (0) target = $region13
    $region12: #{tpu_custom_call.1} parent=1 // pred_region
      %23 = dma.done [#allocation3], 256
    $region13: #{tpu_custom_call.1} parent=1 // pred_fallthru
      _
    %v24 = vld [vmem:[%s1] sm:$0xff]
    %v25 = vld [vmem:[#allocation2] sm:$0xff]
    %v26 = vld [vmem:[#allocation2 + $0x8] sm:$0xff]
    %28 = vset.pattern.permute.xlu0 0
    %29 = vperm.xlu0 %28, %v24
    %v30 = vpop.permute.xlu0 %29
    %v32 = vmul.f32 %v25, %v30
    %v33 = vmul.f32 %v26, %v30
    %34 = vset.pattern.permute.xlu0 1
    %35 = vperm.xlu0 %34, %v24
    %v36 = vpop.permute.xlu0 %35
    %v38 = vadd.f32 %v32, %v36
    %v39 = vadd.f32 %v33, %v36
    %40 = vst [vmem:[#allocation5] sm:$0xff] %v38
    %41 = vst [vmem:[#allocation5 + $0x8] sm:$0xff] %v39
    // Predicated region
    $region14: #{tpu_custom_call.1} parent=1 // pred_check
      _
    $region15: #{tpu_custom_call.1} parent=1 // pred_check_branch
      %43 = sbr.rel (0) target = $region17
    $region16: #{tpu_custom_call.1} parent=1 // pred_region
      %s45 = ssub.s32 256, 256
      %46 = vsyncadd [#allocation4], %s45
      %s48 = sshll.u32 [#allocation5], 4
      %s49 = int_to_ptr.vmem [resolvable:$true] %s48
      %51 = dma.vmem_to_hbm [thread:$0]  %s49, 256, %s2, [#allocation4]
    $region17: #{tpu_custom_call.1} parent=1 // pred_fallthru
      _
    // Predicated region
    $region18: #{tpu_custom_call.1} parent=1 // pred_check
      _
    $region19: #{tpu_custom_call.1} parent=1 // pred_check_branch
      %53 = sbr.rel (0) target = $region21
    $region20: #{tpu_custom_call.1} parent=1 // pred_region
      %54 = dma.done [#allocation4], 256
    $region21: #{tpu_custom_call.1} parent=1 // pred_fallthru
      _
    %55 = vsyncpa [#allocation3], 1
    %56 = vsyncpa [#allocation4], 1

</llo_original>
